<compile_context>
chip_gen: v6e
topology: v6e:2x2x1
jax: 0.10.0
libtpu: 0.0.40
codegen_flags: <defaults>
</compile_context>

<pallas_src>
import functools

import jax
import jax.numpy as jnp
from jax import lax
from jax.experimental import pallas as pl
from jax.experimental.pallas import tpu as pltpu

IGNORE_INDEX = 255
SMOOTH = 0.0
EPS = 1e-10

# Keep the estimated per-tile working set well below the 32 MiB scoped VMEM we
# request (safe on v5e/v6e's 128 MiB and v7x's 64 MiB physical VMEM).
_VMEM_BUDGET_BYTES = 16 * 1024 * 1024
_VMEM_LIMIT_BYTES = 32 * 1024 * 1024


def _pick_rows_per_tile(S, C, in_bytes, lab_bytes, max_rows):
    """Rows of 128 pixels per grid step, sized from a VMEM budget."""
    # Per row: double-buffered logits+labels input blocks plus ~2 C-sized f32
    # intermediates (x, e) and a handful of pixel-sized f32 slabs.
    bytes_per_row = 2 * 128 * (C * in_bytes + lab_bytes) + 512 * (2 * C + 8)
    cap = max(8, _VMEM_BUDGET_BYTES // bytes_per_row)
    if max_rows is not None:               # testing / tuning knob
        cap = min(cap, max(8, max_rows))
    if S <= cap or S <= 8:
        return S                           # single tile along rows
    return (cap // 8) * 8                  # multi-tile: multiple of 8 sublanes


def _dice_partial_kernel(logits_ref, labels_ref, out_ref, pt_acc, nv_acc, *,
                         n_rows, rows_per_tile, fold, ragged):
    """Per-(batch, chunk) partial sums for the dice loss.

    logits_ref: (1, C, S_t, 128) native-dtype logits tile
    labels_ref: (1, S_t, 128) integer labels tile (native narrow dtype)
    out_ref:    (1, 1, 1, 128) f32; lane 0 = sum p_true, lane 1 = n_valid
    pt_acc/nv_acc: (1, R, 128) f32 VMEM accumulators (per-lane partials)
    """
    p = pl.program_id(1)
    t = pl.program_id(2)
    nt = pl.num_programs(2)

    @pl.when(t == 0)
    def _():
        pt_acc[...] = jnp.zeros_like(pt_acc)
        nv_acc[...] = jnp.zeros_like(nv_acc)

    x = logits_ref[...].astype(jnp.float32)          # (1, C, S_t, 128)
    lbl = labels_ref[...].astype(jnp.int32)          # (1, S_t, 128)

    # Valid = not ignore_index (labels are assumed to lie in [0, C) U {255}).
    valid = lbl != IGNORE_INDEX
    if ragged:
        # Only needed when the grid over-covers the row axis: mask rows past
        # the true extent.  Out-of-bounds garbage logits cannot poison the
        # result because the final per-pixel value goes through a select.
        row0 = (p * nt + t) * rows_per_tile
        row = row0 + lax.broadcasted_iota(jnp.int32, lbl.shape, 1)
        valid = valid & (row < n_rows)

    # Softmax pieces along the class axis (elementwise over C dense slabs).
    m = jnp.max(x, axis=1, keepdims=True)            # (1, 1, S_t, 128)
    e = jnp.exp(x - m)                               # (1, C, S_t, 128)
    s = jnp.sum(e, axis=1)                           # (1, S_t, 128)

    # Numerator: e at the true class, via select (no one-hot cast+multiply).
    cls = lax.broadcasted_iota(jnp.int32, x.shape, 1)
    num = jnp.sum(jnp.where(cls == lbl[:, None, :, :], e, 0.0), axis=1)

    pt = jnp.where(valid, num / s, 0.0)              # p_true per valid pixel
    vf = valid.astype(jnp.float32)

    # Per-tile pre-reduction into small dense accumulators (f32).
    pt_acc[...] += fold(pt)
    nv_acc[...] += fold(vf)

    @pl.when(t == nt - 1)
    def _():
        inter = jnp.sum(pt_acc[...])
        nval = jnp.sum(nv_acc[...])
        lane = lax.broadcasted_iota(jnp.int32, out_ref.shape, 3)
        out_ref[...] = jnp.where(lane == 0, inter,
                                 jnp.where(lane == 1, nval, 0.0))


def dice_loss(logits, labels, *, smooth=SMOOTH, eps=EPS, max_rows_per_tile=None):
    """logits: [B, C, H, W] (f32 or bf16); labels: [B, H, W] int (255 == ignore)."""
    B, C, H, W = logits.shape
    hw = H * W
    S = pl.cdiv(hw, 128)                  # rows of 128 pixels
    hw_pad = S * 128

    # Free, contiguous reshapes to the lane-/sublane-dense 2-D pixel layout.
    x = logits.reshape(B, C, hw)
    y = labels.reshape(B, hw)             # keep native (narrow) dtype on the wire
    if hw_pad != hw:
        # Rare fallback (hw not a multiple of 128): one-time pad.  Padded
        # pixels carry IGNORE_INDEX, so they are masked out in-kernel.
        x = jnp.pad(x, ((0, 0), (0, 0), (0, hw_pad - hw)))
        y = jnp.pad(y, ((0, 0), (0, hw_pad - hw)), constant_values=IGNORE_INDEX)
    x = x.reshape(B, C, S, 128)
    y = y.reshape(B, S, 128)

    in_bytes = jnp.dtype(logits.dtype).itemsize
    lab_bytes = jnp.dtype(labels.dtype).itemsize
    S_t = _pick_rows_per_tile(S, C, in_bytes, lab_bytes, max_rows_per_tile)

    n_tiles = pl.cdiv(S, S_t)
    # With a single image, split the pixel rows into 2 parallel chunks so a
    # 2-TensorCore chip (v7x) keeps both cores / DMA feeds busy.
    n_par = 2 if (B == 1 and n_tiles >= 2) else 1
    n_t = pl.cdiv(n_tiles, n_par)
    ragged = (n_par * n_t * S_t) != S

    # Accumulator height: one vreg (8 sublanes) when tiles are sublane-aligned.
    R = 8 if S_t % 8 == 0 else S_t

    def fold(v):                          # (1, S_t, 128) -> (1, R, 128), pure VPU
        if S_t == R:
            return v
        return jnp.sum(v.reshape(1, S_t // R, R, 128), axis=1)

    last_tile = n_tiles - 1

    def x_map(b, p, t):
        return (b, 0, jnp.minimum(p * n_t + t, last_tile), 0)

    def y_map(b, p, t):
        return (b, jnp.minimum(p * n_t + t, last_tile), 0)

    kernel = functools.partial(_dice_partial_kernel, n_rows=S,
                               rows_per_tile=S_t, fold=fold, ragged=ragged)

    partial = pl.pallas_call(
        kernel,
        out_shape=jax.ShapeDtypeStruct((B, n_par, 1, 128), jnp.float32),
        grid_spec=pltpu.PrefetchScalarGridSpec(
            num_scalar_prefetch=0,
            grid=(B, n_par, n_t),
            in_specs=[
                pl.BlockSpec((1, C, S_t, 128), x_map),
                pl.BlockSpec((1, S_t, 128), y_map),
            ],
            out_specs=pl.BlockSpec((1, 1, 1, 128), lambda b, p, t: (b, p, 0, 0)),
            scratch_shapes=[
                pltpu.VMEM((1, R, 128), jnp.float32),
                pltpu.VMEM((1, R, 128), jnp.float32),
            ],
        ),
        compiler_params=pltpu.CompilerParams(
            dimension_semantics=("parallel", "parallel", "arbitrary"),
            vmem_limit_bytes=_VMEM_LIMIT_BYTES),
    )(x, y)

    inter = jnp.sum(partial[..., 0])
    nval = jnp.sum(partial[..., 1])
    # Softmax rows sum to 1 and one-hot rows sum to 1, so
    # preds_flat.sum() == labels_flat.sum() == n_valid.
    return 1.0 - (2.0 * inter + smooth) / (2.0 * nval + smooth + eps)


def _reference(logits, labels, smooth=SMOOTH, eps=EPS):
    """Pure-JAX mirror of the PyTorch DiceLoss.forward semantics."""
    B, C, H, W = logits.shape
    p = jax.nn.softmax(logits.astype(jnp.float32), axis=1)      # [B,C,H,W]
    p = jnp.transpose(p, (0, 2, 3, 1)).reshape(-1, C)           # [N, C]
    y = labels.reshape(-1)
    valid = (y != IGNORE_INDEX)
    vf = valid.astype(jnp.float32)
    y_safe = jnp.where(valid, y, 0)
    onehot = jax.nn.one_hot(y_safe, C, dtype=jnp.float32) * vf[:, None]
    p_masked = p * vf[:, None]
    inter = jnp.sum(p_masked * onehot)
    return 1.0 - (2.0 * inter + smooth) / (
        jnp.sum(p_masked) + jnp.sum(onehot) + smooth + eps)


def _make_inputs(key, B, C, H, W, dtype=jnp.float32):
    k1, k2, k3 = jax.random.split(key, 3)
    logits = jax.random.normal(k1, (B, C, H, W), dtype=jnp.float32).astype(dtype)
    labels = jax.random.randint(k2, (B, H, W), 0, C, dtype=jnp.int32)
    ignore_mask = jax.random.bernoulli(k3, 0.1, (B, H, W))
    labels = jnp.where(ignore_mask, IGNORE_INDEX, labels)
    return logits, labels


if __name__ == "__main__":
    key = jax.random.PRNGKey(0)
    keys = jax.random.split(key, 4)

    # 1) Base small case (single tile, B parallel axis).
    logits, labels = _make_inputs(keys[0], 2, 4, 16, 16)
    out = jax.block_until_ready(dice_loss(logits, labels))
    ref = jax.block_until_ready(_reference(logits, labels))
    assert jnp.allclose(out, ref, rtol=1e-4, atol=1e-5), (out, ref)

    # 2) bf16 logits on the wire (f32 compute inside the kernel).
    logits_bf, labels_bf = _make_inputs(keys[1], 2, 4, 16, 16, dtype=jnp.bfloat16)
    out = jax.block_until_ready(dice_loss(logits_bf, labels_bf))
    ref = jax.block_until_ready(_reference(logits_bf, labels_bf))
    assert jnp.allclose(out, ref, rtol=1e-3, atol=1e-4), (out, ref)

    # 3) Multi-tile accumulation + B=1 parallel chunk split + in-tile fold.
    logits, labels = _make_inputs(keys[2], 1, 3, 64, 64)
    out = jax.block_until_ready(dice_loss(logits, labels, max_rows_per_tile=16))
    ref = jax.block_until_ready(_reference(logits, labels))
    assert jnp.allclose(out, ref, rtol=1e-4, atol=1e-5), (out, ref)

    # 4) Ragged pixel count (hw % 128 != 0) + ragged row tiling.
    logits, labels = _make_inputs(keys[3], 1, 5, 40, 40)
    out = jax.block_until_ready(dice_loss(logits, labels, max_rows_per_tile=8))
    ref = jax.block_until_ready(_reference(logits, labels))
    assert jnp.allclose(out, ref, rtol=1e-4, atol=1e-5), (out, ref)

    print("KERNEL_OK")
</pallas_src>

<mosaic_0001>
module attributes {stable_mosaic.version = 11 : i64} {
  func.func @_dice_partial_kernel(%arg0: i32, %arg1: i32, %arg2: i32, %arg3: memref<1x4x2x128xf32, #tpu.memory_space<vmem>>, %arg4: memref<1x2x128xi32, #tpu.memory_space<vmem>>, %arg5: memref<1x1x1x128xf32, #tpu.memory_space<vmem>>, %arg6: memref<1x2x128xf32, #tpu.memory_space<vmem>>, %arg7: memref<1x2x128xf32, #tpu.memory_space<vmem>>) attributes {dimension_semantics = [#tpu.dimension_semantics<parallel>, #tpu.dimension_semantics<parallel>, #tpu.dimension_semantics<arbitrary>], iteration_bounds = array<i64: 2, 1, 1>, scalar_prefetch = 0 : i64, scratch_operands = 2 : i64, tpu.core_type = #tpu.core_type<tc>, window_params = [{transform_indices = @transform_0, window_bounds = array<i64: 1, 4, 2, 128>}, {transform_indices = @transform_1, window_bounds = array<i64: 1, 2, 128>}, {transform_indices = @transform_2, window_bounds = array<i64: 1, 1, 1, 128>}]} {
    %c0_i32 = arith.constant 0 : i32
    %0 = arith.cmpi eq, %arg2, %c0_i32 : i32
    %1 = arith.extui %0 : i1 to i32
    %c0_i32_0 = arith.constant 0 : i32
    %2 = arith.cmpi ne, %1, %c0_i32_0 : i32
    scf.if %2 {
      %cst_25 = arith.constant 0.000000e+00 : f32
      %34 = vector.broadcast %cst_25 : f32 to vector<1x2x128xf32>
      %c0_26 = arith.constant 0 : index
      %c0_27 = arith.constant 0 : index
      %c0_28 = arith.constant 0 : index
      %35 = vector.load %arg6[%c0_26, %c0_27, %c0_28] : memref<1x2x128xf32, #tpu.memory_space<vmem>>, vector<1x2x128xf32>
      tpu.vector_store %arg6[%c0_26, %c0_27, %c0_28], %34 {strides = array<i32>} : memref<1x2x128xf32, #tpu.memory_space<vmem>>, vector<1x2x128xf32>,
      %cst_29 = arith.constant 0.000000e+00 : f32
      %36 = vector.broadcast %cst_29 : f32 to vector<1x2x128xf32>
      %c0_30 = arith.constant 0 : index
      %c0_31 = arith.constant 0 : index
      %c0_32 = arith.constant 0 : index
      %37 = vector.load %arg7[%c0_30, %c0_31, %c0_32] : memref<1x2x128xf32, #tpu.memory_space<vmem>>, vector<1x2x128xf32>
      tpu.vector_store %arg7[%c0_30, %c0_31, %c0_32], %36 {strides = array<i32>} : memref<1x2x128xf32, #tpu.memory_space<vmem>>, vector<1x2x128xf32>,
    } else {
    }
    %c0 = arith.constant 0 : index
    %c0_1 = arith.constant 0 : index
    %c0_2 = arith.constant 0 : index
    %c0_3 = arith.constant 0 : index
    %3 = vector.load %arg3[%c0, %c0_1, %c0_2, %c0_3] : memref<1x4x2x128xf32, #tpu.memory_space<vmem>>, vector<1x4x2x128xf32>
    %c0_4 = arith.constant 0 : index
    %c0_5 = arith.constant 0 : index
    %c0_6 = arith.constant 0 : index
    %4 = vector.load %arg4[%c0_4, %c0_5, %c0_6] : memref<1x2x128xi32, #tpu.memory_space<vmem>>, vector<1x2x128xi32>
    %c255_i32 = arith.constant 255 : i32
    %5 = vector.broadcast %c255_i32 : i32 to vector<1x2x128xi32>
    %6 = arith.cmpi ne, %4, %5 : vector<1x2x128xi32>
    %cst = arith.constant dense<0xFF800000> : vector<1x2x128xf32>
    %7 = vector.multi_reduction <maximumf>, %3, %cst [1] : vector<1x4x2x128xf32> to vector<1x2x128xf32>
    %8 = vector.shape_cast %7 : vector<1x2x128xf32> to vector<1x1x2x128xf32>
    %9 = vector.broadcast %8 : vector<1x1x2x128xf32> to vector<1x4x2x128xf32>
    %10 = arith.subf %3, %9 : vector<1x4x2x128xf32>
    %11 = math.exp %10 : vector<1x4x2x128xf32>
    %cst_7 = arith.constant dense<0.000000e+00> : vector<1x2x128xf32>
    %12 = vector.multi_reduction <add>, %11, %cst_7 [1] : vector<1x4x2x128xf32> to vector<1x2x128xf32>
    %13 = tpu.iota {dimensions = array<i32: 1>} : vector<1x4x2x128xi32>
    %14 = vector.shape_cast %4 : vector<1x2x128xi32> to vector<1x1x2x128xi32>
    %15 = vector.broadcast %14 : vector<1x1x2x128xi32> to vector<1x4x2x128xi32>
    %16 = arith.cmpi eq, %13, %15 : vector<1x4x2x128xi32>
    %cst_8 = arith.constant 0.000000e+00 : f32
    %17 = vector.broadcast %cst_8 : f32 to vector<1x4x2x128xf32>
    %18 = arith.select %16, %11, %17 : vector<1x4x2x128xi1>, vector<1x4x2x128xf32>
    %cst_9 = arith.constant dense<0.000000e+00> : vector<1x2x128xf32>
    %19 = vector.multi_reduction <add>, %18, %cst_9 [1] : vector<1x4x2x128xf32> to vector<1x2x128xf32>
    %20 = arith.divf %19, %12 : vector<1x2x128xf32>
    %cst_10 = arith.constant 0.000000e+00 : f32
    %21 = vector.broadcast %cst_10 : f32 to vector<1x2x128xf32>
    %22 = arith.select %6, %20, %21 : vector<1x2x128xi1>, vector<1x2x128xf32>
    %23 = arith.extui %6 : vector<1x2x128xi1> to vector<1x2x128xi32>
    %24 = arith.sitofp %23 : vector<1x2x128xi32> to vector<1x2x128xf32>
    %c0_11 = arith.constant 0 : index
    %c0_12 = arith.constant 0 : index
    %c0_13 = arith.constant 0 : index
    %25 = vector.load %arg6[%c0_11, %c0_12, %c0_13] : memref<1x2x128xf32, #tpu.memory_space<vmem>>, vector<1x2x128xf32>
    %26 = arith.addf %25, %22 : vector<1x2x128xf32>
    %c0_14 = arith.constant 0 : index
    %c0_15 = arith.constant 0 : index
    %c0_16 = arith.constant 0 : index
    %27 = vector.load %arg6[%c0_14, %c0_15, %c0_16] : memref<1x2x128xf32, #tpu.memory_space<vmem>>, vector<1x2x128xf32>
    tpu.vector_store %arg6[%c0_14, %c0_15, %c0_16], %26 {strides = array<i32>} : memref<1x2x128xf32, #tpu.memory_space<vmem>>, vector<1x2x128xf32>,
    %c0_17 = arith.constant 0 : index
    %c0_18 = arith.constant 0 : index
    %c0_19 = arith.constant 0 : index
    %28 = vector.load %arg7[%c0_17, %c0_18, %c0_19] : memref<1x2x128xf32, #tpu.memory_space<vmem>>, vector<1x2x128xf32>
    %29 = arith.addf %28, %24 : vector<1x2x128xf32>
    %c0_20 = arith.constant 0 : index
    %c0_21 = arith.constant 0 : index
    %c0_22 = arith.constant 0 : index
    %30 = vector.load %arg7[%c0_20, %c0_21, %c0_22] : memref<1x2x128xf32, #tpu.memory_space<vmem>>, vector<1x2x128xf32>
    tpu.vector_store %arg7[%c0_20, %c0_21, %c0_22], %29 {strides = array<i32>} : memref<1x2x128xf32, #tpu.memory_space<vmem>>, vector<1x2x128xf32>,
    %c0_i32_23 = arith.constant 0 : i32
    %31 = arith.cmpi eq, %arg2, %c0_i32_23 : i32
    %32 = arith.extui %31 : i1 to i32
    %c0_i32_24 = arith.constant 0 : i32
    %33 = arith.cmpi ne, %32, %c0_i32_24 : i32
    scf.if %33 {
      %c0_25 = arith.constant 0 : index
      %c0_26 = arith.constant 0 : index
      %c0_27 = arith.constant 0 : index
      %34 = vector.load %arg6[%c0_25, %c0_26, %c0_27] : memref<1x2x128xf32, #tpu.memory_space<vmem>>, vector<1x2x128xf32>
      %35 = vector.shape_cast %34 : vector<1x2x128xf32> to vector<1x1x2x128xf32>
      %cst_28 = arith.constant dense<0.000000e+00> : vector<1xf32>
      %36 = vector.multi_reduction <add>, %35, %cst_28 [1, 2, 3] : vector<1x1x2x128xf32> to vector<1xf32>
      %37 = vector.shape_cast %36 : vector<1xf32> to vector<1x1x1x1xf32>
      %38 = vector.extract %37[0, 0, 0, 0] : f32 from vector<1x1x1x1xf32>
      %c0_29 = arith.constant 0 : index
      %c0_30 = arith.constant 0 : index
      %c0_31 = arith.constant 0 : index
      %39 = vector.load %arg7[%c0_29, %c0_30, %c0_31] : memref<1x2x128xf32, #tpu.memory_space<vmem>>, vector<1x2x128xf32>
      %40 = vector.shape_cast %39 : vector<1x2x128xf32> to vector<1x1x2x128xf32>
      %cst_32 = arith.constant dense<0.000000e+00> : vector<1xf32>
      %41 = vector.multi_reduction <add>, %40, %cst_32 [1, 2, 3] : vector<1x1x2x128xf32> to vector<1xf32>
      %42 = vector.shape_cast %41 : vector<1xf32> to vector<1x1x1x1xf32>
      %43 = vector.extract %42[0, 0, 0, 0] : f32 from vector<1x1x1x1xf32>
      %44 = tpu.iota {dimensions = array<i32: 3>} : vector<1x1x1x128xi32>
      %c0_i32_33 = arith.constant 0 : i32
      %45 = vector.broadcast %c0_i32_33 : i32 to vector<1x1x1x128xi32>
      %46 = arith.cmpi eq, %44, %45 : vector<1x1x1x128xi32>
      %c1_i32 = arith.constant 1 : i32
      %47 = vector.broadcast %c1_i32 : i32 to vector<1x1x1x128xi32>
      %48 = arith.cmpi eq, %44, %47 : vector<1x1x1x128xi32>
      %cst_34 = arith.constant 0.000000e+00 : f32
      %49 = vector.broadcast %43 : f32 to vector<1x1x1x128xf32>
      %50 = vector.broadcast %cst_34 : f32 to vector<1x1x1x128xf32>
      %51 = arith.select %48, %49, %50 : vector<1x1x1x128xi1>, vector<1x1x1x128xf32>
      %52 = vector.broadcast %38 : f32 to vector<1x1x1x128xf32>
      %53 = arith.select %46, %52, %51 : vector<1x1x1x128xi1>, vector<1x1x1x128xf32>
      %c0_35 = arith.constant 0 : index
      %c0_36 = arith.constant 0 : index
      %c0_37 = arith.constant 0 : index
      %c0_38 = arith.constant 0 : index
      %54 = vector.load %arg5[%c0_35, %c0_36, %c0_37, %c0_38] : memref<1x1x1x128xf32, #tpu.memory_space<vmem>>, vector<1x1x1x128xf32>
      tpu.vector_store %arg5[%c0_35, %c0_36, %c0_37, %c0_38], %53 {strides = array<i32>} : memref<1x1x1x128xf32, #tpu.memory_space<vmem>>, vector<1x1x1x128xf32>,
    } else {
    }
    return
  }
  func.func @transform_0(%arg0: i32, %arg1: i32, %arg2: i32) -> (i32, i32, i32, i32) {
    %c1_i32 = arith.constant 1 : i32
    %0 = arith.muli %arg1, %c1_i32 : i32
    %1 = arith.addi %0, %arg2 : i32
    %c0_i32 = arith.constant 0 : i32
    %2 = arith.minsi %1, %c0_i32 : i32
    %c0_i32_0 = arith.constant 0 : i32
    %c0_i32_1 = arith.constant 0 : i32
    %c0_i32_2 = arith.constant 0 : i32
    return %arg0, %c0_i32_0, %2, %c0_i32_1 : i32, i32, i32, i32
  }
  func.func @transform_1(%arg0: i32, %arg1: i32, %arg2: i32) -> (i32, i32, i32) {
    %c1_i32 = arith.constant 1 : i32
    %0 = arith.muli %arg1, %c1_i32 : i32
    %1 = arith.addi %0, %arg2 : i32
    %c0_i32 = arith.constant 0 : i32
    %2 = arith.minsi %1, %c0_i32 : i32
    %c0_i32_0 = arith.constant 0 : i32
    %c0_i32_1 = arith.constant 0 : i32
    return %arg0, %2, %c0_i32_0 : i32, i32, i32
  }
  func.func @transform_2(%arg0: i32, %arg1: i32, %arg2: i32) -> (i32, i32, i32, i32) {
    %c0_i32 = arith.constant 0 : i32
    %c0_i32_0 = arith.constant 0 : i32
    %c0_i32_1 = arith.constant 0 : i32
    return %arg0, %arg1, %c0_i32, %c0_i32_0 : i32, i32, i32, i32
  }
}

</mosaic_0001>

<llo_original>
// kernel: tpu_custom_call.1
$region0: #{tpu_custom_call.1}
  #allocation0 [shape = 'u32[]', space=smem, size = 0x4, offset = 0x4, fixed_abs, tag = 'smem constant byte address 0x4 - core index']
  #allocation1 [shape = 'u32[144,128]{1,0:T(1,128)}', space=vmem, size = 0x12000, scoped, tag = 'internal scratch']
  #allocation2 [shape = 'f32[1,2,128]{2,1,0:T(2,128)}', space=vmem, size = 0x400, scoped, tag = 'scratch operand']
  #allocation3 [shape = 'f32[1,2,128]{2,1,0:T(2,128)}', space=vmem, size = 0x400, scoped, tag = 'scratch operand']
  %s0 = inlined_call_operand.hbm [shape: f32[2,4,2,128], index: 0, kind: input, shape index: {}]
  %s1 = inlined_call_operand.hbm [shape: s32[2,2,128], index: 1, kind: input, shape index: {}]
  %s2 = inlined_call_operand.hbm [shape: f32[2,1,1,128], index: 2, kind: output, shape index: {}]
  %s3 = sld [smem:[#allocation0]]
  $region57: #{tpu_custom_call.1} parent=0
    _
  %s5 = ssub.s32 1, %s3
  %s6 = scalar_select 0, %s5, %s3
  $region1: #{tpu_custom_call.1} parent=0
    #allocation4 [shape = 'u8[8192]{0}', space=vmem, size = 0x2000, scoped, tag = 'input window, operand 0']
    #allocation5 [shape = 's32[2]{0}', space=sflag, size = 0x8, scoped, tag = 'scoped memory for tpu_custom_call.1']
    #allocation6 [shape = 's32[2]{0}', space=sflag, size = 0x8, scoped, tag = 'scoped memory for tpu_custom_call.1']
    #allocation7 [shape = 'u8[2048]{0}', space=vmem, size = 0x800, scoped, tag = 'input window, operand 1']
    #allocation8 [shape = 's32[2]{0}', space=sflag, size = 0x8, scoped, tag = 'scoped memory for tpu_custom_call.1']
    #allocation9 [shape = 'u8[1024]{0}', space=vmem, size = 0x400, scoped, tag = 'output window, operand 0']
    %7 = vsyncpa [#allocation5], 0
    %s8 = scalar_lea.sflag [#allocation5], 1
    %9 = vsyncpa %s8, 0
    %10 = vsyncpa [#allocation8], 0
    %s11 = scalar_lea.sflag [#allocation8], 1
    %12 = vsyncpa %s11, 0
    %13 = vsyncpa [#allocation6], 0
    %s14 = scalar_lea.sflag [#allocation6], 1
    %15 = vsyncpa %s14, 0
    loop: start=0, step=1, limit=4
    $region2: #{tpu_custom_call.1} parent=1 // loop_pre_header
      _
    $region3: #{tpu_custom_call.1} parent=1 // loop_header
      %s17 = sphi 0, %s21
      %p18 = scmp.ge.s32.totalorder %s17, 4
      %s24 = sphi 0, %s43
      %s25 = sphi 0, %s39
      %s26 = sphi 0, %s35
      %s27 = sphi 0, %s24
      %s28 = sphi 0, %s25
      %s29 = sphi 0, %s26
      %s30 = sphi 0, %s27
      %s31 = sphi 0, %s28
      %s32 = sphi 0, %s29
      %s54 = sphi 0, %s56
      %s57 = sphi 0, %s54
      %s58 = sphi 0, %s57
      %s74 = sphi 0, %s58
      %s88 = sphi 0, %s90
      %s91 = sphi 0, %s88
      %s92 = sphi 0, %s91
      %s108 = sphi 0, %s92
      %s116 = sphi 0, %s118
      %s119 = sphi 0, %s116
      %s120 = sphi 0, %s119
      %s136 = sphi 0, %s120
    $region4: #{tpu_custom_call.1} parent=1 // loop_header_branch
      %20 = sbr.rel (%p18) target = $region8
    $region5: #{tpu_custom_call.1} parent=1 // loop_body
      %s22 = ssub.s32 %s17, 1
      %s23 = ssub.s32 %s17, 2
      %s33 = sadd.s32 1, %s26
      %p34 = scmp.ge.s32.totalorder %s33, 1
      %s35 = scalar_select %p34, 0, %s33
      %s36 = sadd.s32 1, %s25
      %s37 = scalar_select %p34, %s36, %s25
      %p38 = scmp.ge.s32.totalorder %s37, 1
      %s39 = scalar_select %p38, 0, %s37
      %s40 = sadd.s32 1, %s24
      %s41 = scalar_select %p38, %s40, %s24
      %p42 = scmp.ge.s32.totalorder %s41, 2
      %s43 = scalar_select %p42, 0, %s41
      %s44 = sadd.s32 %s25, %s26
      %p45 = scmp.lt.s32.totalorder %s44, 0
      %s46 = scalar_select %p45, %s44, 0
      %s47 = sadd.s32 %s39, %s35
      %p48 = scmp.lt.s32.totalorder %s47, 0
      %s49 = scalar_select %p48, %s47, 0
      %s50 = ssub.s32 %s24, %s43
      %s51 = ssub.s32 %s46, %s49
      %s52 = sor.u32 %s50, %s51
      %p53 = scmp.eq.s32.totalorder %s52, 0
      %s55 = sadd.s32 %s54, 1
      %s56 = scalar_select %p53, %s54, %s55
      %p59 = pneg %p53
      %p60 = scmp.eq.s32.totalorder %s17, 1
      %p61 = por %p59, %p60
      %p62 = scmp.ne.s32.totalorder %s54, %s57
      %p63 = scmp.eq.s32.totalorder %s17, 0
      %p64 = por %p62, %p63
      %p65 = scmp.ne.s32.totalorder %s54, %s57
      %p66 = scmp.eq.s32.totalorder %s22, 1
      %p67 = por %p65, %p66
      %p68 = scmp.ne.s32.totalorder %s57, %s58
      %p69 = scmp.eq.s32.totalorder %s22, 0
      %p70 = por %p68, %p69
      %p71 = scmp.ne.s32.totalorder %s57, %s58
      %p72 = scmp.eq.s32.totalorder %s23, 1
      %p73 = por %p71, %p72
      %p75 = scmp.ne.s32.totalorder %s58, %s74
      %p76 = scmp.eq.s32.totalorder %s23, 0
      %p77 = por %p75, %p76
      %s78 = sadd.s32 %s25, %s26
      %p79 = scmp.lt.s32.totalorder %s78, 0
      %s80 = scalar_select %p79, %s78, 0
      %s81 = sadd.s32 %s39, %s35
      %p82 = scmp.lt.s32.totalorder %s81, 0
      %s83 = scalar_select %p82, %s81, 0
      %s84 = ssub.s32 %s24, %s43
      %s85 = ssub.s32 %s80, %s83
      %s86 = sor.u32 %s84, %s85
      %p87 = scmp.eq.s32.totalorder %s86, 0
      %s89 = sadd.s32 %s88, 1
      %s90 = scalar_select %p87, %s88, %s89
      %p93 = pneg %p87
      %p94 = scmp.eq.s32.totalorder %s17, 1
      %p95 = por %p93, %p94
      %p96 = scmp.ne.s32.totalorder %s88, %s91
      %p97 = scmp.eq.s32.totalorder %s17, 0
      %p98 = por %p96, %p97
      %p99 = scmp.ne.s32.totalorder %s88, %s91
      %p100 = scmp.eq.s32.totalorder %s22, 1
      %p101 = por %p99, %p100
      %p102 = scmp.ne.s32.totalorder %s91, %s92
      %p103 = scmp.eq.s32.totalorder %s22, 0
      %p104 = por %p102, %p103
      %p105 = scmp.ne.s32.totalorder %s91, %s92
      %p106 = scmp.eq.s32.totalorder %s23, 1
      %p107 = por %p105, %p106
      %p109 = scmp.ne.s32.totalorder %s92, %s108
      %p110 = scmp.eq.s32.totalorder %s23, 0
      %p111 = por %p109, %p110
      %s112 = ssub.s32 %s24, %s43
      %s113 = ssub.s32 %s25, %s39
      %s114 = sor.u32 %s112, %s113
      %p115 = scmp.eq.s32.totalorder %s114, 0
      %s117 = sadd.s32 %s116, 1
      %s118 = scalar_select %p115, %s116, %s117
      %p121 = pneg %p115
      %p122 = scmp.eq.s32.totalorder %s17, 1
      %p123 = por %p121, %p122
      %p124 = scmp.ne.s32.totalorder %s116, %s119
      %p125 = scmp.eq.s32.totalorder %s17, 0
      %p126 = por %p124, %p125
      %p127 = scmp.ne.s32.totalorder %s116, %s119
      %p128 = scmp.eq.s32.totalorder %s22, 1
      %p129 = por %p127, %p128
      %p130 = scmp.ne.s32.totalorder %s119, %s120
      %p131 = scmp.eq.s32.totalorder %s22, 0
      %p132 = por %p130, %p131
      %p133 = scmp.ne.s32.totalorder %s119, %s120
      %p134 = scmp.eq.s32.totalorder %s23, 1
      %p135 = por %p133, %p134
      %p137 = scmp.ne.s32.totalorder %s120, %s136
      %p138 = scmp.eq.s32.totalorder %s23, 0
      %p139 = por %p137, %p138
      %p140 = scmp.le.s32.totalorder 1, %s17
      %p141 = scmp.lt.s32.totalorder %s17, 3
      %p142 = pnand %p140, %p141
      %p143 = pneg %p142
      // Predicated region
      $region9: #{tpu_custom_call.1} parent=5 // pred_check
        _
      $region10: #{tpu_custom_call.1} parent=5 // pred_check_branch
        %145 = sbr.rel (%p142) target = $region12
      $region11: #{tpu_custom_call.1} parent=5 // pred_region
        %s146 = ssub.s32 %s17, 1
      $region12: #{tpu_custom_call.1} parent=5 // pred_fallthru
        _
      %p147 = scmp.lt.s32.totalorder %s17, 2
      // Predicated region
      $region13: #{tpu_custom_call.1} parent=5 // pred_check
        %p148 = pneg %p147
      $region14: #{tpu_custom_call.1} parent=5 // pred_check_branch
        %150 = sbr.rel (%p148) target = $region16
      $region15: #{tpu_custom_call.1} parent=5 // pred_region
        // Predicated region
        $region17: #{tpu_custom_call.1} parent=15 // pred_check
          %p151 = pneg %p64
        $region18: #{tpu_custom_call.1} parent=15 // pred_check_branch
          %153 = sbr.rel (%p151) target = $region20
        $region19: #{tpu_custom_call.1} parent=15 // pred_region
          %s154 = sand.u32 %s54, 1
          %s155 = scalar_lea.sflag [#allocation5], %s154
          %s156 = sand.u32 %s54, 1
          %s157 = smul.addr %s156, 8
          %s158 = scalar_lea.vmem [#allocation4], %s157
          %s159 = sadd.s32 %s25, %s26
          %p160 = scmp.lt.s32.totalorder %s159, 0
          %s161 = scalar_select %p160, %s159, 0
          %s163 = ssub.s32 128, 128
          %164 = vsyncadd %s155, %s163
          %s165 = smul.addr %s24, 4
          %s166 = sadd.s32 %s161, %s165
          %s167 = smul.addr %s166, 32
          %s168 = scalar_lea.hbm %s0, %s167
          %s169 = sshll.u32 %s158, 4
          %s170 = int_to_ptr.vmem [resolvable:$true] %s169
          %175 = dma.hbm_to_vmem [thread:$0]  %s168, 128, %s170, %s155, 32, 32, 2
        $region20: #{tpu_custom_call.1} parent=15 // pred_fallthru
          _
        // Predicated region
        $region21: #{tpu_custom_call.1} parent=15 // pred_check
          %p176 = pneg %p98
        $region22: #{tpu_custom_call.1} parent=15 // pred_check_branch
          %178 = sbr.rel (%p176) target = $region24
        $region23: #{tpu_custom_call.1} parent=15 // pred_region
          %s179 = sand.u32 %s88, 1
          %s180 = scalar_lea.sflag [#allocation8], %s179
          %s181 = sand.u32 %s88, 1
          %s182 = smul.addr %s181, 2
          %s183 = scalar_lea.vmem [#allocation7], %s182
          %s184 = sadd.s32 %s25, %s26
          %p185 = scmp.lt.s32.totalorder %s184, 0
          %s186 = scalar_select %p185, %s184, 0
          %s188 = ssub.s32 32, 32
          %189 = vsyncadd %s180, %s188
          %s190 = sadd.s32 %s186, %s24
          %s191 = smul.addr %s190, 32
          %s192 = scalar_lea.hbm %s1, %s191
          %s194 = sshll.u32 %s183, 4
          %s195 = int_to_ptr.vmem [resolvable:$true] %s194
          %197 = dma.hbm_to_vmem [thread:$0]  %s192, 32, %s195, %s180
        $region24: #{tpu_custom_call.1} parent=15 // pred_fallthru
          _
      $region16: #{tpu_custom_call.1} parent=5 // pred_fallthru
        _
      %p198 = scmp.le.s32.totalorder 1, %s17
      %p199 = scmp.lt.s32.totalorder %s17, 3
      %p200 = pnand %p198, %p199
      %p201 = pneg %p200
      // Predicated region
      $region25: #{tpu_custom_call.1} parent=5 // pred_check
        _
      $region26: #{tpu_custom_call.1} parent=5 // pred_check_branch
        %203 = sbr.rel (%p200) target = $region28
      $region27: #{tpu_custom_call.1} parent=5 // pred_region
        %s204 = ssub.s32 %s17, 1
        %s205 = sand.u32 %s57, 1
        %s206 = scalar_lea.sflag [#allocation5], %s205
        %s207 = sand.u32 %s57, 1
        %s208 = smul.addr %s207, 8
        %s209 = scalar_lea.vmem [#allocation4], %s208
        // Predicated region
        $region29: #{tpu_custom_call.1} parent=27 // pred_check
          %p210 = pneg %p70
        $region30: #{tpu_custom_call.1} parent=27 // pred_check_branch
          %212 = sbr.rel (%p210) target = $region32
        $region31: #{tpu_custom_call.1} parent=27 // pred_region
          %213 = dma.done %s206, 128
        $region32: #{tpu_custom_call.1} parent=27 // pred_fallthru
          _
        %s214 = sand.u32 %s91, 1
        %s215 = scalar_lea.sflag [#allocation8], %s214
        %s216 = sand.u32 %s91, 1
        %s217 = smul.addr %s216, 2
        %s218 = scalar_lea.vmem [#allocation7], %s217
        // Predicated region
        $region33: #{tpu_custom_call.1} parent=27 // pred_check
          %p219 = pneg %p104
        $region34: #{tpu_custom_call.1} parent=27 // pred_check_branch
          %221 = sbr.rel (%p219) target = $region36
        $region35: #{tpu_custom_call.1} parent=27 // pred_region
          %222 = dma.done %s215, 32
        $region36: #{tpu_custom_call.1} parent=27 // pred_fallthru
          _
        %s223 = sand.u32 %s57, 1
        %s224 = scalar_lea.sflag [#allocation5], %s223
        %s225 = sand.u32 %s57, 1
        %s226 = smul.addr %s225, 8
        %s227 = scalar_lea.vmem [#allocation4], %s226
        %p228 = pneg %p70
        %p229 = pneg %p67
        %s230 = sand.u32 %s91, 1
        %s231 = scalar_lea.sflag [#allocation8], %s230
        %s232 = sand.u32 %s91, 1
        %s233 = smul.addr %s232, 2
        %s234 = scalar_lea.vmem [#allocation7], %s233
        %p235 = pneg %p104
        %p236 = pneg %p101
        %p237 = pneg %p132
        %p238 = pneg %p129
        %s239 = sand.u32 %s119, 1
        %s240 = scalar_lea.sflag [#allocation6], %s239
        %s241 = sand.u32 %s119, 1
        %s242 = scalar_lea.vmem [#allocation9], %s241
        %s243 = sadd.s32 %s28, %s29
        %p244 = scmp.lt.s32.totalorder %s243, 0
        %s245 = scalar_select %p244, %s243, 0
        %s246 = sadd.s32 %s28, %s29
        %p247 = scmp.lt.s32.totalorder %s246, 0
        %s248 = scalar_select %p247, %s246, 0
        %p249 = scmp.eq.s32.totalorder %s29, 0
        // Predicated region
        $region37: #{tpu_custom_call.1} parent=27 // pred_check
          %p250 = pneg %p249
        $region38: #{tpu_custom_call.1} parent=27 // pred_check_branch
          %252 = sbr.rel (%p250) target = $region40
        $region39: #{tpu_custom_call.1} parent=27 // pred_region
          %253 = vst [vmem:[#allocation2] sm:$0x3] 0.0
          %254 = vst [vmem:[#allocation3] sm:$0x3] 0.0
        $region40: #{tpu_custom_call.1} parent=27 // pred_fallthru
          _
        %v255 = vld [vmem:[%s209] sm:$0x3]
        %v256 = vld [vmem:[%s209 + $0x2] sm:$0x3]
        %v257 = vld [vmem:[%s209 + $0x4] sm:$0x3]
        %v258 = vld [vmem:[%s209 + $0x6] sm:$0x3]
        %v259 = vld [vmem:[%s218] sm:$0x3]
        %vm260 = vcmp.ne.s32.totalorder %v259, 255
        %vm261 = vcmask 1041408
        %v262 = vsel %vm261, %v255, -inf
        %v263 = vsel %vm261, %v256, -inf
        %v264 = vsel %vm261, %v257, -inf
        %v265 = vsel %vm261, %v258, -inf
        %v266 = vmax.f32 %v262, %v263
        %v267 = vmax.f32 %v264, %v265
        %v268 = vmax.f32 %v266, %v267
        %v269 = vsub.f32 %v255, %v268
        %v270 = vsub.f32 %v256, %v268
        %v271 = vsub.f32 %v257, %v268
        %v272 = vsub.f32 %v258, %v268
        %v273 = vmul.f32 %v269, 1.442695
        %v274 = vpow.pop %v273
        %v275 = vmul.f32 %v270, 1.442695
        %v276 = vpow.pop %v275
        %v277 = vmul.f32 %v271, 1.442695
        %v278 = vpow.pop %v277
        %v279 = vmul.f32 %v272, 1.442695
        %v280 = vpow.pop %v279
        %v281 = vsel %vm261, %v274, 0.0
        %v282 = vsel %vm261, %v276, 0.0
        %v283 = vadd.f32 %v281, %v282
        %v284 = vsel %vm261, %v278, 0.0
        %v285 = vadd.f32 %v283, %v284
        %v286 = vsel %vm261, %v280, 0.0
        %v287 = vadd.f32 %v285, %v286
        %vm288 = vcmp.eq.s32.totalorder %v259, 0
        %vm289 = vcmp.eq.s32.totalorder %v259, 1
        %vm290 = vcmp.eq.s32.totalorder %v259, 2
        %vm291 = vcmp.eq.s32.totalorder %v259, 3
        %v292 = vsel %vm288, %v274, 0.0
        %v293 = vsel %vm289, %v276, 0.0
        %v294 = vsel %vm290, %v278, 0.0
        %v295 = vsel %vm291, %v280, 0.0
        %v296 = vsel %vm261, %v292, 0.0
        %v297 = vsel %vm261, %v293, 0.0
        %v298 = vadd.f32 %v296, %v297
        %v299 = vsel %vm261, %v294, 0.0
        %v300 = vadd.f32 %v298, %v299
        %v301 = vsel %vm261, %v295, 0.0
        %v302 = vadd.f32 %v300, %v301
        %v303 = vrcp.pop %v287
        %v304 = vmul.f32 %v302, %v303
        %v305 = vsel %vm260, %v304, 0.0
        %v306 = vsel %vm260, 1, 0
        %v307 = vcvt.s32.f32 %v306
        %v308 = vld [vmem:[#allocation2] sm:$0x3]
        %v309 = vadd.f32 %v308, %v305
        %310 = vst [vmem:[#allocation2] sm:$0x3] %v309
        %v311 = vld [vmem:[#allocation3] sm:$0x3]
        %v312 = vadd.f32 %v311, %v307
        %313 = vst [vmem:[#allocation3] sm:$0x3] %v312
        // Predicated region
        $region41: #{tpu_custom_call.1} parent=27 // pred_check
          %p314 = pneg %p249
        $region42: #{tpu_custom_call.1} parent=27 // pred_check_branch
          %316 = sbr.rel (%p314) target = $region44
        $region43: #{tpu_custom_call.1} parent=27 // pred_region
          %v317 = vld [vmem:[#allocation2] sm:$0x3]
          %v318 = vsel %vm261, %v317, 0.0
          %319 = vadd.xlane.f32.xlu0 %v318
          %v320 = vpop.xlane.xlu0 %319
          %v321 = vrot.slane %v320, 4
          %v322 = vadd.f32 %v320, %v321
          %v323 = vrot.slane %v322, 2
          %v324 = vadd.f32 %v322, %v323
          %v325 = vrot.slane %v324, 1
          %v326 = vadd.f32 %v324, %v325
          %s327 = vtos %v326
          %v328 = vld [vmem:[#allocation3] sm:$0x3]
          %v329 = vsel %vm261, %v328, 0.0
          %330 = vadd.xlane.f32.xlu0 %v329
          %v331 = vpop.xlane.xlu0 %330
          %v332 = vrot.slane %v331, 4
          %v333 = vadd.f32 %v331, %v332
          %v334 = vrot.slane %v333, 2
          %v335 = vadd.f32 %v333, %v334
          %v336 = vrot.slane %v335, 1
          %v337 = vadd.f32 %v335, %v336
          %s338 = vtos %v337
          %v339 = vlaneseq
          %v340 = vand.u32 %v339, 127
          %vm341 = vcmp.eq.s32.totalorder %v340, 0
          %vm342 = vcmp.eq.s32.totalorder %v340, 1
          %v343 = vstv %s338
          %v344 = vsel %vm342, %v343, 0.0
          %v345 = vstv %s327
          %v346 = vsel %vm341, %v345, %v344
          %347 = vst [vmem:[%s242] sm:$0x1] %v346
        $region44: #{tpu_custom_call.1} parent=27 // pred_fallthru
          _
        %s348 = sand.u32 %s119, 1
        %s349 = scalar_lea.sflag [#allocation6], %s348
        %s350 = sand.u32 %s119, 1
        %s351 = scalar_lea.vmem [#allocation9], %s350
        // Predicated region
        $region45: #{tpu_custom_call.1} parent=27 // pred_check
          %p352 = pneg %p129
        $region46: #{tpu_custom_call.1} parent=27 // pred_check_branch
          %354 = sbr.rel (%p352) target = $region48
        $region47: #{tpu_custom_call.1} parent=27 // pred_region
          %s356 = ssub.s32 16, 16
          %357 = vsyncadd %s349, %s356
          %s358 = sadd.s32 %s28, %s27
          %s359 = smul.addr %s358, 16
          %s360 = scalar_lea.hbm %s2, %s359
          %s362 = sshll.u32 %s351, 4
          %s363 = int_to_ptr.vmem [resolvable:$true] %s362
          %365 = dma.vmem_to_hbm [thread:$0]  %s363, 16, %s360, %s349
        $region48: #{tpu_custom_call.1} parent=27 // pred_fallthru
          _
      $region28: #{tpu_custom_call.1} parent=5 // pred_fallthru
        _
      %p366 = scmp.le.s32.totalorder 2, %s17
      // Predicated region
      $region49: #{tpu_custom_call.1} parent=5 // pred_check
        %p367 = pneg %p366
      $region50: #{tpu_custom_call.1} parent=5 // pred_check_branch
        %369 = sbr.rel (%p367) target = $region52
      $region51: #{tpu_custom_call.1} parent=5 // pred_region
        %s370 = ssub.s32 %s17, 2
        // Predicated region
        $region53: #{tpu_custom_call.1} parent=51 // pred_check
          %p371 = pneg %p135
        $region54: #{tpu_custom_call.1} parent=51 // pred_check_branch
          %373 = sbr.rel (%p371) target = $region56
        $region55: #{tpu_custom_call.1} parent=51 // pred_region
          %s374 = sand.u32 %s120, 1
          %s375 = scalar_lea.sflag [#allocation6], %s374
          %s376 = sand.u32 %s120, 1
          %s377 = scalar_lea.vmem [#allocation9], %s376
          %378 = dma.done %s375, 16
        $region56: #{tpu_custom_call.1} parent=51 // pred_fallthru
          _
      $region52: #{tpu_custom_call.1} parent=5 // pred_fallthru
        _
    $region6: #{tpu_custom_call.1} parent=1 // loop_footer
      %s21 = sadd.s32 1, %s17
    $region7: #{tpu_custom_call.1} parent=1 // loop_footer_branch
      %16 = sbr.rel target = $region3
    $region8: #{tpu_custom_call.1} parent=1 // loop_exit
      _
    %379 = vsyncpa [#allocation5], 1
    %s380 = scalar_lea.sflag [#allocation5], 1
    %381 = vsyncpa %s380, 1
    %382 = vsyncpa [#allocation8], 1
    %s383 = scalar_lea.sflag [#allocation8], 1
    %384 = vsyncpa %s383, 1
    %385 = vsyncpa [#allocation6], 1
    %s386 = scalar_lea.sflag [#allocation6], 1
    %387 = vsyncpa %s386, 1

</llo_original>
